<compile_context>
chip_gen: v6e
topology: v6e:2x2x1
jax: 0.10.0
libtpu: 0.0.40
codegen_flags: <defaults>
</compile_context>

<pallas_src>
import math
import functools

import jax
import jax.numpy as jnp
from jax.experimental import pallas as pl
from jax.experimental.pallas import tpu as pltpu

_VMEM_LIMIT_BYTES = 48 * 1024 * 1024


def _pick_tile(n, candidates=(512, 256, 128)):
    """Largest candidate tile that divides n, else n itself (full extent)."""
    for c in candidates:
        if n % c == 0:
            return c
    return n


def _qkv_proj_kernel(x_ref, w_ref, b_ref, o_ref):
    """(tm, H) @ (H, 3H) + b — fused Q/K/V projection, one MXU pass over x."""
    y = jnp.dot(x_ref[...], w_ref[...], preferred_element_type=jnp.float32)
    o_ref[...] = (y + b_ref[...]).astype(o_ref.dtype)


def _attn_kernel(q_ref, k_ref, v_ref, wo_ref, bo_ref, o_ref, *, n_dk,
                 compute_dtype):
    """Attention + output projection for one (batch, q-tile); heads batched."""
    qh = q_ref[0]          # (nh, tq, dk)
    kh = k_ref[0]          # (nh, S,  dk)
    vh = v_ref[0]          # (nh, S,  dk)

    # scores: contract the dk dims directly (no explicit transpose of K).
    s = jnp.einsum("hqd,hkd->hqk", qh, kh,
                   preferred_element_type=jnp.float32)
    s = s * (1.0 / math.sqrt(n_dk))

    # Numerically-stable softmax in f32; reciprocal goes to the EUP slot.
    s = s - jnp.max(s, axis=-1, keepdims=True)
    p = jnp.exp(s)
    p = p * pl.reciprocal(jnp.sum(p, axis=-1, keepdims=True), approx=True)
    # TODO(synk): training-mode dropout on the attention probabilities and the
    # optional `mask` argument are not implemented (eval / mask=None path).

    cv = jnp.einsum("hqk,hkd->hqd", p.astype(compute_dtype), vh,
                    preferred_element_type=jnp.float32)          # (nh, tq, dk)

    # Output projection decomposed over heads: out = sum_h cv_h @ Wo[h] + bo
    # (avoids any in-kernel head concat / relayout; output store is (tq, H)).
    out_h = jnp.einsum("hqd,hdo->hqo", cv.astype(compute_dtype), wo_ref[...],
                       preferred_element_type=jnp.float32)       # (nh, tq, H)
    out = jnp.sum(out_h, axis=0) + bo_ref[...]                   # (tq, H)
    o_ref[0] = out.astype(o_ref.dtype)


def multi_headed_attention(x, params, *, n_heads, compute_dtype=jnp.float32):
    """x: (B, S, H) float32. params: dict of weights/biases. Returns (B, S, H)."""
    B, S, H = x.shape
    assert H % n_heads == 0
    n_dk = H // n_heads

    # Fused QKV weights: one (H, 3H) matmul instead of three (H, H) ones.
    wqkv = jnp.concatenate(
        [params["wq"], params["wk"], params["wv"]], axis=1).astype(compute_dtype)
    bqkv = jnp.concatenate(
        [params["bq"], params["bk"], params["bv"]]).reshape(1, 3 * H).astype(jnp.float32)
    # Output projection reshaped head-wise -> applied as a batched matmul.
    wo_h = params["wo"].reshape(n_heads, n_dk, H).astype(compute_dtype)
    bo = params["bo"].reshape(1, H).astype(jnp.float32)

    # ---- Stage 1: fused QKV projection over flattened (B*S) token rows ----
    M = B * S
    x2 = x.reshape(M, H).astype(compute_dtype)
    tm = _pick_tile(M)
    qkv = pl.pallas_call(
        _qkv_proj_kernel,
        out_shape=jax.ShapeDtypeStruct((M, 3 * H), compute_dtype),
        grid=(M // tm,),
        in_specs=[pl.BlockSpec((tm, H), lambda i: (i, 0)),
                  pl.BlockSpec((H, 3 * H), lambda i: (0, 0)),
                  pl.BlockSpec((1, 3 * H), lambda i: (0, 0))],
        out_specs=pl.BlockSpec((tm, 3 * H), lambda i: (i, 0)),
        compiler_params=pltpu.CompilerParams(
            dimension_semantics=("parallel",),
            vmem_limit_bytes=_VMEM_LIMIT_BYTES),
    )(x2, wqkv, bqkv)

    # Wrapper-side layout plumbing (XLA): split heads -> (B, nh, S, dk).
    q, k, v = jnp.split(qkv, 3, axis=1)

    def to_heads(t):
        return t.reshape(B, S, n_heads, n_dk).transpose(0, 2, 1, 3)

    q4, k4, v4 = to_heads(q), to_heads(k), to_heads(v)

    # ---- Stage 2: attention + output projection, grid (batch, q-tiles) ----
    # TODO(synk): for very long S on v7x (64 MiB VMEM), tile KV with an
    # online-softmax accumulator instead of holding full-S K/V blocks.
    tq = _pick_tile(S)
    kernel = functools.partial(_attn_kernel, n_dk=n_dk,
                               compute_dtype=compute_dtype)
    out = pl.pallas_call(
        kernel,
        out_shape=jax.ShapeDtypeStruct((B, S, H), x.dtype),
        grid=(B, S // tq),
        in_specs=[pl.BlockSpec((1, n_heads, tq, n_dk), lambda b, qi: (b, 0, qi, 0)),
                  pl.BlockSpec((1, n_heads, S, n_dk), lambda b, qi: (b, 0, 0, 0)),
                  pl.BlockSpec((1, n_heads, S, n_dk), lambda b, qi: (b, 0, 0, 0)),
                  pl.BlockSpec((n_heads, n_dk, H), lambda b, qi: (0, 0, 0)),
                  pl.BlockSpec((1, H), lambda b, qi: (0, 0))],
        out_specs=pl.BlockSpec((1, tq, H), lambda b, qi: (b, qi, 0)),
        compiler_params=pltpu.CompilerParams(
            dimension_semantics=("parallel", "parallel"),
            vmem_limit_bytes=_VMEM_LIMIT_BYTES),
    )(q4, k4, v4, wo_h, bo)
    return out


def _reference(x, params, *, n_heads):
    """Plain-JAX reference matching the PyTorch forward (mask=None, eval)."""
    B, S, H = x.shape
    n_dk = H // n_heads

    def lin(t, w, b):
        return t @ w + b

    q = lin(x, params["wq"], params["bq"]).reshape(B, S, n_heads, n_dk).transpose(0, 2, 1, 3)
    k = lin(x, params["wk"], params["bk"]).reshape(B, S, n_heads, n_dk).transpose(0, 2, 1, 3)
    v = lin(x, params["wv"], params["bv"]).reshape(B, S, n_heads, n_dk).transpose(0, 2, 1, 3)
    scores = jnp.einsum("bhqd,bhkd->bhqk", q, k) / math.sqrt(n_dk)
    attn = jax.nn.softmax(scores, axis=-1)
    cv = jnp.einsum("bhqk,bhkd->bhqd", attn, v)
    cv = cv.transpose(0, 2, 1, 3).reshape(B, S, H)
    return lin(cv, params["wo"], params["bo"])


def _init_params(key, hidden):
    ks = jax.random.split(key, 8)
    scale = 1.0 / math.sqrt(hidden)
    return {
        "wq": jax.random.uniform(ks[0], (hidden, hidden), jnp.float32, -scale, scale),
        "bq": jax.random.uniform(ks[1], (hidden,), jnp.float32, -scale, scale),
        "wk": jax.random.uniform(ks[2], (hidden, hidden), jnp.float32, -scale, scale),
        "bk": jax.random.uniform(ks[3], (hidden,), jnp.float32, -scale, scale),
        "wv": jax.random.uniform(ks[4], (hidden, hidden), jnp.float32, -scale, scale),
        "bv": jax.random.uniform(ks[5], (hidden,), jnp.float32, -scale, scale),
        "wo": jax.random.uniform(ks[6], (hidden, hidden), jnp.float32, -scale, scale),
        "bo": jax.random.uniform(ks[7], (hidden,), jnp.float32, -scale, scale),
    }


if __name__ == "__main__":
    B, S, H = 2, 8, 32
    n_heads = 4

    key = jax.random.PRNGKey(0)
    k_x, k_p = jax.random.split(key)
    x = jax.random.normal(k_x, (B, S, H), jnp.float32)
    params = _init_params(k_p, H)

    ref = _reference(x, params, n_heads=n_heads)

    # f32 MXU path (default): tight check.
    out = multi_headed_attention(x, params, n_heads=n_heads)
    out = jax.block_until_ready(out)
    assert out.shape == (B, S, H)
    assert jnp.allclose(out, ref, atol=5e-3, rtol=5e-3), "f32 mismatch vs reference"

    # bf16-operand MXU path (f32 accumulation): looser check.
    out_bf16 = multi_headed_attention(x, params, n_heads=n_heads,
                                      compute_dtype=jnp.bfloat16)
    out_bf16 = jax.block_until_ready(out_bf16)
    assert out_bf16.shape == (B, S, H)
    assert jnp.allclose(out_bf16.astype(jnp.float32), ref, atol=1e-1, rtol=1e-1), \
        "bf16 mismatch vs reference"

    print("KERNEL_OK")
</pallas_src>

<mosaic_0001>
module attributes {stable_mosaic.version = 11 : i64} {
  func.func @_qkv_proj_kernel(%arg0: i32, %arg1: memref<16x32xf32, #tpu.memory_space<vmem>>, %arg2: memref<32x96xf32, #tpu.memory_space<vmem>>, %arg3: memref<1x96xf32, #tpu.memory_space<vmem>>, %arg4: memref<16x96xf32, #tpu.memory_space<vmem>>) attributes {dimension_semantics = [#tpu.dimension_semantics<parallel>], iteration_bounds = array<i64: 1>, scalar_prefetch = 0 : i64, scratch_operands = 0 : i64, tpu.core_type = #tpu.core_type<tc>, window_params = [{transform_indices = @transform_0, window_bounds = array<i64: 16, 32>}, {pipeline_mode = #tpu.pipeline_mode<synchronous>, transform_indices = @transform_1, window_bounds = array<i64: 32, 96>}, {pipeline_mode = #tpu.pipeline_mode<synchronous>, transform_indices = @transform_2, window_bounds = array<i64: 1, 96>}, {transform_indices = @transform_3, window_bounds = array<i64: 16, 96>}]} {
    %c0 = arith.constant 0 : index
    %c0_0 = arith.constant 0 : index
    %0 = vector.load %arg1[%c0, %c0_0] : memref<16x32xf32, #tpu.memory_space<vmem>>, vector<16x32xf32>
    %c0_1 = arith.constant 0 : index
    %c0_2 = arith.constant 0 : index
    %1 = vector.load %arg2[%c0_1, %c0_2] : memref<32x96xf32, #tpu.memory_space<vmem>>, vector<32x96xf32>
    %cst = arith.constant dense<0.000000e+00> : vector<16x96xf32>
    %2 = tpu.matmul %0, %1, %cst {dimension_numbers = #tpu.dot_dimension_numbers<[1], [0], [0], [1], [0, 0, 1, 1], [], []>} : vector<16x32xf32>, vector<32x96xf32>, vector<16x96xf32> -> vector<16x96xf32>
    %c0_3 = arith.constant 0 : index
    %c0_4 = arith.constant 0 : index
    %3 = vector.load %arg3[%c0_3, %c0_4] : memref<1x96xf32, #tpu.memory_space<vmem>>, vector<1x96xf32>
    %4 = vector.broadcast %3 : vector<1x96xf32> to vector<16x96xf32>
    %5 = arith.addf %2, %4 : vector<16x96xf32>
    %c0_5 = arith.constant 0 : index
    %c0_6 = arith.constant 0 : index
    %6 = vector.load %arg4[%c0_5, %c0_6] : memref<16x96xf32, #tpu.memory_space<vmem>>, vector<16x96xf32>
    tpu.vector_store %arg4[%c0_5, %c0_6], %5 {strides = array<i32>} : memref<16x96xf32, #tpu.memory_space<vmem>>, vector<16x96xf32>,
    return
  }
  func.func @transform_0(%arg0: i32) -> (i32, i32) {
    %c0_i32 = arith.constant 0 : i32
    %c0_i32_0 = arith.constant 0 : i32
    return %arg0, %c0_i32 : i32, i32
  }
  func.func @transform_1(%arg0: i32) -> (i32, i32) {
    %c0_i32 = arith.constant 0 : i32
    %c0_i32_0 = arith.constant 0 : i32
    %c0_i32_1 = arith.constant 0 : i32
    return %c0_i32, %c0_i32_0 : i32, i32
  }
  func.func @transform_2(%arg0: i32) -> (i32, i32) {
    %c0_i32 = arith.constant 0 : i32
    %c0_i32_0 = arith.constant 0 : i32
    %c0_i32_1 = arith.constant 0 : i32
    return %c0_i32, %c0_i32_0 : i32, i32
  }
  func.func @transform_3(%arg0: i32) -> (i32, i32) {
    %c0_i32 = arith.constant 0 : i32
    %c0_i32_0 = arith.constant 0 : i32
    return %arg0, %c0_i32 : i32, i32
  }
}

</mosaic_0001>

<llo_original>
// kernel: tpu_custom_call.1
$region0: #{tpu_custom_call.1}
  #allocation0 [shape = 'u32[]', space=smem, size = 0x4, offset = 0x4, fixed_abs, tag = 'smem constant byte address 0x4 - core index']
  #allocation1 [shape = 'u32[144,128]{1,0:T(1,128)}', space=vmem, size = 0x12000, scoped, tag = 'internal scratch']
  %s0 = inlined_call_operand.hbm [shape: f32[16,32], index: 0, kind: input, shape index: {}]
  %s1 = inlined_call_operand.hbm [shape: f32[32,96], index: 1, kind: input, shape index: {}]
  %s2 = inlined_call_operand.vmem [shape: f32[1,96], index: 2, kind: input, shape index: {}]
  %s3 = inlined_call_operand.hbm [shape: f32[16,96], index: 3, kind: output, shape index: {}]
  %s4 = sld [smem:[#allocation0]]
  $region30: #{tpu_custom_call.1} parent=0
    _
  %s6 = ssub.s32 1, %s4
  %s7 = scalar_select 0, %s6, %s4
  $region1: #{tpu_custom_call.1} parent=0
    #allocation2 [shape = 'u8[8192]{0}', space=vmem, size = 0x2000, scoped, tag = 'input window, operand 0, single buffered']
    #allocation3 [shape = 's32[1]{0}', space=sflag, size = 0x4, scoped, tag = 'scoped memory for tpu_custom_call.1']
    #allocation4 [shape = 's32[1]{0}', space=sflag, size = 0x4, scoped, tag = 'scoped memory for tpu_custom_call.1']
    #allocation5 [shape = 'u8[16384]{0}', space=vmem, size = 0x4000, scoped, tag = 'input window, operand 1, single buffered']
    #allocation6 [shape = 's32[1]{0}', space=sflag, size = 0x4, scoped, tag = 'scoped memory for tpu_custom_call.1']
    #allocation7 [shape = 'u8[8192]{0}', space=vmem, size = 0x2000, scoped, tag = 'output window, operand 0, single buffered']
    %8 = vsyncpa [#allocation3], 0
    %9 = vsyncpa [#allocation6], 0
    %10 = vsyncpa [#allocation4], 0
    // Predicated region
    $region2: #{tpu_custom_call.1} parent=1 // pred_check
      _
    $region3: #{tpu_custom_call.1} parent=1 // pred_check_branch
      %12 = sbr.rel (0) target = $region5
    $region4: #{tpu_custom_call.1} parent=1 // pred_region
      %s14 = ssub.s32 256, 256
      %15 = vsyncadd [#allocation3], %s14
      %s16 = sshll.u32 [#allocation2], 4
      %s17 = int_to_ptr.vmem [resolvable:$true] %s16
      %22 = dma.hbm_to_vmem [thread:$0]  %s0, 256, %s17, [#allocation3], 128, 128, 8
    $region5: #{tpu_custom_call.1} parent=1 // pred_fallthru
      _
    // Predicated region
    $region6: #{tpu_custom_call.1} parent=1 // pred_check
      _
    $region7: #{tpu_custom_call.1} parent=1 // pred_check_branch
      %24 = sbr.rel (0) target = $region9
    $region8: #{tpu_custom_call.1} parent=1 // pred_region
      %s26 = ssub.s32 512, 512
      %27 = vsyncadd [#allocation6], %s26
      %s28 = sshll.u32 [#allocation5], 4
      %s29 = int_to_ptr.vmem [resolvable:$true] %s28
      %34 = dma.hbm_to_vmem [thread:$0]  %s1, 512, %s29, [#allocation6], 128, 128, 8
    $region9: #{tpu_custom_call.1} parent=1 // pred_fallthru
      _
    // Predicated region
    $region10: #{tpu_custom_call.1} parent=1 // pred_check
      _
    $region11: #{tpu_custom_call.1} parent=1 // pred_check_branch
      %36 = sbr.rel (0) target = $region13
    $region12: #{tpu_custom_call.1} parent=1 // pred_region
      _
    $region13: #{tpu_custom_call.1} parent=1 // pred_fallthru
      _
    // Predicated region
    $region14: #{tpu_custom_call.1} parent=1 // pred_check
      _
    $region15: #{tpu_custom_call.1} parent=1 // pred_check_branch
      %38 = sbr.rel (0) target = $region17
    $region16: #{tpu_custom_call.1} parent=1 // pred_region
      %39 = dma.done [#allocation3], 256
    $region17: #{tpu_custom_call.1} parent=1 // pred_fallthru
      _
    // Predicated region
    $region18: #{tpu_custom_call.1} parent=1 // pred_check
      _
    $region19: #{tpu_custom_call.1} parent=1 // pred_check_branch
      %41 = sbr.rel (0) target = $region21
    $region20: #{tpu_custom_call.1} parent=1 // pred_region
      %42 = dma.done [#allocation6], 512
    $region21: #{tpu_custom_call.1} parent=1 // pred_fallthru
      _
    %v43 = vld [vmem:[#allocation2] sm:$0xff]
    %v44 = vld [vmem:[#allocation2 + $0x8] sm:$0xff]
    %v45 = vld [vmem:[#allocation5] sm:$0xff]
    %v46 = vld [vmem:[#allocation5 + $0x8] sm:$0xff]
    %v47 = vld [vmem:[#allocation5 + $0x10] sm:$0xff]
    %v48 = vld [vmem:[#allocation5 + $0x18] sm:$0xff]
    %v49 = vld [vmem:[%s2] sm:$0x1]
    %v51 = vlaneseq
    %v52 = vshrl.u32 %v51, 7
    %v53 = vsub.s32 0, %v52
    %v54 = vrot.slane %v49, %v53
    %vm56 = vcmask 261120
    %v58 = vsel %vm56, %v43, 0
    %v61 = vsel %vm56, %v44, 0
    %63 = vmatprep.subr.mxu0 0.0
    %64 = vmatpush1.msra.mxu0 0.0
    %65 = vmatprep.subr.mxu0 0.0
    %66 = vmatpush1.msra.mxu0 0.0
    %67 = vmatprep.subr.mxu0 0.0
    %68 = vmatpush1.msra.mxu0 0.0
    %69 = vmatprep.subr.mxu0 0.0
    %70 = vmatpush1.msra.mxu0 0.0
    %71 = vmatprep.subr.mxu0 0.0
    %72 = vmatpush1.msra.mxu0 0.0
    %73 = vmatprep.subr.mxu0 0.0
    %74 = vmatpush1.msra.mxu0 0.0
    %75 = vmatprep.subr.mxu0 0.0
    %76 = vmatpush1.msra.mxu0 0.0
    %77 = vmatprep.subr.mxu0 0.0
    %78 = vmatpush1.msra.mxu0 0.0
    %79 = vmatprep.subr.mxu0 0.0
    %80 = vmatpush1.msra.mxu0 0.0
    %81 = vmatprep.subr.mxu0 0.0
    %82 = vmatpush1.msra.mxu0 0.0
    %83 = vmatprep.subr.mxu0 0.0
    %84 = vmatpush1.msra.mxu0 0.0
    %85 = vmatprep.subr.mxu0 0.0
    %86 = vmatpush1.msra.mxu0 0.0
    %87 = vmatprep.subr.mxu0 0.0
    %88 = vmatpush1.msra.mxu0 %v48
    %89 = vmatprep.subr.mxu0 0.0
    %90 = vmatpush1.msra.mxu0 %v47
    %91 = vmatprep.subr.mxu0 0.0
    %92 = vmatpush1.msra.mxu0 %v46
    %93 = vmatprep.subr.mxu0 0.0
    %94 = vmatpush1.msra.mxu0 %v45
    %95 = vmatprep.subr.mxu0 0.0
    %96 = vmatpush2.msra.mxu0 0.0
    %97 = vmatprep.subr.mxu0 0.0
    %98 = vmatpush2.msra.mxu0 0.0
    %99 = vmatprep.subr.mxu0 0.0
    %100 = vmatpush2.msra.mxu0 0.0
    %101 = vmatprep.subr.mxu0 0.0
    %102 = vmatpush2.msra.mxu0 0.0
    %103 = vmatprep.subr.mxu0 0.0
    %104 = vmatpush2.msra.mxu0 0.0
    %105 = vmatprep.subr.mxu0 0.0
    %106 = vmatpush2.msra.mxu0 0.0
    %107 = vmatprep.subr.mxu0 0.0
    %108 = vmatpush2.msra.mxu0 0.0
    %109 = vmatprep.subr.mxu0 0.0
    %110 = vmatpush2.msra.mxu0 0.0
    %111 = vmatprep.subr.mxu0 0.0
    %112 = vmatpush2.msra.mxu0 0.0
    %113 = vmatprep.subr.mxu0 0.0
    %114 = vmatpush2.msra.mxu0 0.0
    %115 = vmatprep.subr.mxu0 0.0
    %116 = vmatpush2.msra.mxu0 0.0
    %117 = vmatprep.subr.mxu0 0.0
    %118 = vmatpush2.msra.mxu0 0.0
    %119 = vmatprep.subr.mxu0 0.0
    %120 = vmatpush2.msra.mxu0 0.0
    %121 = vmatprep.subr.mxu0 0.0
    %122 = vmatpush2.msra.mxu0 0.0
    %123 = vmatprep.subr.mxu0 0.0
    %124 = vmatpush2.msra.mxu0 0.0
    %125 = vmatprep.subr.mxu0 0.0
    %126 = vmatpush2.msra.mxu0 0.0
    %127 = vmatprep.mubr.f32.mxu0 0.0
    %128 = vmatmul.mubr.f32.gmra.mxu0 %v58
    %v129 = vpop.f32.mrf.mxu0
    %v130 = vadd.f32 %v54, %v129
    %v131 = vpop.f32.mrf.mxu0
    %132 = vmatprep.mubr.f32.mxu0 0.0
    %133 = vmatmul.mubr.f32.gmra.mxu0 %v61
    %v134 = vpop.f32.mrf.mxu0
    %v135 = vadd.f32 %v54, %v134
    %v136 = vpop.f32.mrf.mxu0
    %137 = vdwg.mxu0
    %vm138 = vcmask 785408
    %139 = vst.msk [vmem:[#allocation7] sm:$0xff] %vm138, %v130
    %140 = vst.msk [vmem:[#allocation7 + $0x8] sm:$0xff] %vm138, %v135
    // Predicated region
    $region22: #{tpu_custom_call.1} parent=1 // pred_check
      _
    $region23: #{tpu_custom_call.1} parent=1 // pred_check_branch
      %142 = sbr.rel (0) target = $region25
    $region24: #{tpu_custom_call.1} parent=1 // pred_region
      %s144 = ssub.s32 256, 256
      %145 = vsyncadd [#allocation4], %s144
      %s146 = sshll.u32 [#allocation7], 4
      %s147 = int_to_ptr.vmem [resolvable:$true] %s146
      %152 = dma.vmem_to_hbm [thread:$0]  %s147, 256, %s3, [#allocation4], 128, 128, 8
    $region25: #{tpu_custom_call.1} parent=1 // pred_fallthru
      _
    // Predicated region
    $region26: #{tpu_custom_call.1} parent=1 // pred_check
      _
    $region27: #{tpu_custom_call.1} parent=1 // pred_check_branch
      %154 = sbr.rel (0) target = $region29
    $region28: #{tpu_custom_call.1} parent=1 // pred_region
      %155 = dma.done [#allocation4], 256
    $region29: #{tpu_custom_call.1} parent=1 // pred_fallthru
      _
    %156 = vsyncpa [#allocation3], 1
    %157 = vsyncpa [#allocation6], 1
    %158 = vsyncpa [#allocation4], 1

</llo_original>
